<compile_context>
chip_gen: v6e
topology: v6e:2x2x1
jax: 0.10.0
libtpu: 0.0.40
codegen_flags: <defaults>
</compile_context>

<pallas_src>
import functools

import jax
import jax.numpy as jnp
from jax.experimental import pallas as pl
from jax.experimental.pallas import tpu as pltpu


def _round_up(a, m):
    return (a + m - 1) // m * m


def _dilated_conv_kernel(x_ref, w_ref, b_ref, o_ref, *, k, dilation, l_pad):
    # x_ref: (C_in, L_in_pad)   w_ref: (C_out, K*C_in)
    # b_ref: (C_out, 1) f32     o_ref: (C_out, L_pad)
    # im2col along the contraction axis: the K dilated taps are lane shifts of
    # the same flattened time axis, stacked on sublanes.  Built once per block.
    taps = [x_ref[:, kk * dilation: kk * dilation + l_pad] for kk in range(k)]
    x2 = jnp.concatenate(taps, axis=0) if k > 1 else taps[0]   # (K*C_in, L_pad)

    # Single MXU contraction for the whole block, f32 accumulation.
    acc = jax.lax.dot_general(
        w_ref[...], x2,
        dimension_numbers=(((1,), (0,)), ((), ())),
        preferred_element_type=jnp.float32,
    )                                                          # (C_out, L_pad)

    # One f32 epilogue (bias broadcast emitted once, not per row) and one
    # whole-block lane-dense store (L_pad is a multiple of 128).
    o_ref[...] = (acc + b_ref[...]).astype(o_ref.dtype)


def _vmem_capacity_bytes():
    try:
        return int(pltpu.get_tpu_info().vmem_capacity_bytes)
    except Exception:
        return 64 * 1024 * 1024   # conservative default: v7x per-TensorCore VMEM


def dilated_conv(x, weight, bias, *, dilation=1, stride=1, compute_dtype=None):
    """x: (N, C_in, H, W) NCHW; weight: (C_out, C_in, 1, K); bias: (C_out,).

    Returns NCHW output (N, C_out, H, W_out), W_out = W - dilation*(K-1).
    """
    assert stride == 1, "only stride=1 supported"
    n, c_in, h, w = x.shape
    c_out, c_in_w, kh, k = weight.shape
    assert kh == 1 and c_in_w == c_in
    w_out = w - dilation * (k - 1)
    assert w_out >= 1, "input W too small for this dilation/kernel size"

    out_dtype = x.dtype
    if compute_dtype is not None:     # optional bf16 MXU operands (v6e/v7x)
        x = x.astype(compute_dtype)
    itemsize = x.dtype.itemsize

    # Flatten (H, W) -> L (free, contiguous reshape) and zero-pad the time axis
    # so every dilated tap slice of length l_pad is in-bounds and lane-dense.
    l = h * w
    l_pad = _round_up(l, 128)                  # output lane dim, 128-multiple
    l_in_pad = (k - 1) * dilation + l_pad      # lanes needed by the last tap
    x_flat = x.reshape(n, c_in, l)
    if l_in_pad > l:
        x_flat = jnp.pad(x_flat, ((0, 0), (0, 0), (0, l_in_pad - l)))

    # Fold the K taps into one contraction: (C_out, K*C_in), ordered
    # [tap0:C_in, tap1:C_in, ...] to match the kernel's im2col stacking.
    w2 = jnp.transpose(weight[:, :, 0, :], (0, 2, 1)).reshape(c_out, k * c_in)
    w2 = w2.astype(x.dtype)
    b2 = bias.reshape(c_out, 1).astype(jnp.float32)

    # Honest VMEM accounting, rounded to the (8,128) layout: double-buffered
    # in/out tiles + resident weights/bias + im2col + f32 accumulator.
    x_tile = _round_up(c_in, 8) * _round_up(l_in_pad, 128) * itemsize
    o_tile = _round_up(c_out, 8) * l_pad * itemsize
    w_tile = _round_up(c_out, 8) * _round_up(k * c_in, 128) * itemsize
    b_tile = _round_up(c_out, 8) * 128 * 4
    im2col = _round_up(k * c_in, 8) * l_pad * itemsize
    acc_f32 = _round_up(c_out, 8) * l_pad * 4
    live_bytes = 2 * (x_tile + o_tile) + 2 * (w_tile + b_tile) + im2col + acc_f32

    cap = _vmem_capacity_bytes()               # 64 MiB v7x, 128 MiB v5e/v6e
    vmem_limit = min(max(live_bytes + (8 << 20), 32 << 20), int(0.9 * cap))
    # TODO(synk): if live_bytes still exceeds vmem_limit (huge C*H*W per batch
    # element), the time axis needs halo tiling; not implemented.

    flops = 2 * n * l_pad * k * c_in * c_out
    bytes_accessed = int(
        n * c_in * l_in_pad * itemsize         # activations
        + c_out * k * c_in * itemsize          # weights
        + c_out * 4                            # bias
        + n * c_out * l_pad * itemsize         # output
    )

    kernel = functools.partial(
        _dilated_conv_kernel, k=k, dilation=dilation, l_pad=l_pad
    )

    out_flat = pl.pallas_call(
        kernel,
        out_shape=jax.ShapeDtypeStruct((n, c_out, l_pad), out_dtype),
        grid_spec=pltpu.PrefetchScalarGridSpec(
            num_scalar_prefetch=0,
            grid=(n,),
            in_specs=[
                pl.BlockSpec((None, c_in, l_in_pad), lambda ni: (ni, 0, 0)),
                pl.BlockSpec((c_out, k * c_in), lambda ni: (0, 0)),
                pl.BlockSpec((c_out, 1), lambda ni: (0, 0)),
            ],
            out_specs=pl.BlockSpec((None, c_out, l_pad), lambda ni: (ni, 0, 0)),
        ),
        compiler_params=pltpu.CompilerParams(
            dimension_semantics=("parallel",),
            vmem_limit_bytes=vmem_limit,
        ),
        cost_estimate=pl.CostEstimate(
            flops=flops, transcendentals=0, bytes_accessed=bytes_accessed
        ),
    )(x_flat, w2, b2)

    # Undo the lane padding / flattening; drop the columns a VALID conv drops
    # (these are exactly where the flattened windows crossed a row boundary).
    out = out_flat[:, :, :l].reshape(n, c_out, h, w)[:, :, :, :w_out]
    return out


if __name__ == "__main__":
    # Small shapes consistent with DilatedConv defaults (kernel_size=2).
    N, C_IN, C_OUT, H, W = 2, 4, 8, 4, 16
    KSIZE, DILATION = 2, 2

    key = jax.random.PRNGKey(0)
    kx, kw, kb = jax.random.split(key, 3)

    x = jax.random.normal(kx, (N, C_IN, H, W), dtype=jnp.float32)

    # Deterministic PyTorch-style init: U(-1/sqrt(fan_in), 1/sqrt(fan_in)).
    fan_in = C_IN * 1 * KSIZE
    bound = 1.0 / jnp.sqrt(jnp.float32(fan_in))
    weight = jax.random.uniform(
        kw, (C_OUT, C_IN, 1, KSIZE), minval=-bound, maxval=bound, dtype=jnp.float32
    )
    bias = jax.random.uniform(
        kb, (C_OUT,), minval=-bound, maxval=bound, dtype=jnp.float32
    )

    out = dilated_conv(x, weight, bias, dilation=DILATION, stride=1)
    out = jax.block_until_ready(out)

    # Reference (plain XLA conv) to verify exact semantics.
    ref = jax.lax.conv_general_dilated(
        x, weight,
        window_strides=(1, 1),
        padding="VALID",
        rhs_dilation=(1, DILATION),
        dimension_numbers=("NCHW", "OIHW", "NCHW"),
    ) + bias[None, :, None, None]

    assert out.shape == (N, C_OUT, H, W - DILATION * (KSIZE - 1)), out.shape
    assert jnp.allclose(out, ref, atol=1e-5, rtol=1e-5), "mismatch vs reference conv"

    print("KERNEL_OK")
</pallas_src>

<mosaic_0001>
module attributes {stable_mosaic.version = 11 : i64} {
  func.func @_dilated_conv_kernel(%arg0: i32, %arg1: memref<1x4x130xf32, #tpu.memory_space<vmem>>, %arg2: memref<8x8xf32, #tpu.memory_space<vmem>>, %arg3: memref<8x1xf32, #tpu.memory_space<vmem>>, %arg4: memref<1x8x128xf32, #tpu.memory_space<vmem>>) attributes {dimension_semantics = [#tpu.dimension_semantics<parallel>], iteration_bounds = array<i64: 2>, scalar_prefetch = 0 : i64, scratch_operands = 0 : i64, tpu.core_type = #tpu.core_type<tc>, window_params = [{transform_indices = @transform_0, window_bounds = array<i64: 1, 4, 130>}, {pipeline_mode = #tpu.pipeline_mode<synchronous>, transform_indices = @transform_1, window_bounds = array<i64: 8, 8>}, {pipeline_mode = #tpu.pipeline_mode<synchronous>, transform_indices = @transform_2, window_bounds = array<i64: 8, 1>}, {transform_indices = @transform_3, window_bounds = array<i64: 1, 8, 128>}]} {
    %c0 = arith.constant 0 : index
    %c0_0 = arith.constant 0 : index
    %c0_1 = arith.constant 0 : index
    %0 = vector.load %arg1[%c0, %c0_0, %c0_1] : memref<1x4x130xf32, #tpu.memory_space<vmem>>, vector<1x4x128xf32>
    %1 = vector.shape_cast %0 : vector<1x4x128xf32> to vector<4x128xf32>
    %c0_2 = arith.constant 0 : index
    %c0_3 = arith.constant 0 : index
    %c2 = arith.constant 2 : index
    %2 = vector.load %arg1[%c0_2, %c0_3, %c2] : memref<1x4x130xf32, #tpu.memory_space<vmem>>, vector<1x4x128xf32>
    %3 = vector.shape_cast %2 : vector<1x4x128xf32> to vector<4x128xf32>
    %4 = tpu.concatenate %1, %3 in 0 : vector<4x128xf32>, vector<4x128xf32> -> vector<8x128xf32>
    %c0_4 = arith.constant 0 : index
    %c0_5 = arith.constant 0 : index
    %5 = vector.load %arg2[%c0_4, %c0_5] : memref<8x8xf32, #tpu.memory_space<vmem>>, vector<8x8xf32>
    %cst = arith.constant dense<0.000000e+00> : vector<8x128xf32>
    %6 = tpu.matmul %5, %4, %cst {dimension_numbers = #tpu.dot_dimension_numbers<[1], [0], [0], [1], [0, 0, 1, 1], [], []>} : vector<8x8xf32>, vector<8x128xf32>, vector<8x128xf32> -> vector<8x128xf32>
    %c0_6 = arith.constant 0 : index
    %c0_7 = arith.constant 0 : index
    %7 = vector.load %arg3[%c0_6, %c0_7] : memref<8x1xf32, #tpu.memory_space<vmem>>, vector<8x1xf32>
    %8 = vector.broadcast %7 : vector<8x1xf32> to vector<8x128xf32>
    %9 = arith.addf %6, %8 : vector<8x128xf32>
    %c0_8 = arith.constant 0 : index
    %c0_9 = arith.constant 0 : index
    %c0_10 = arith.constant 0 : index
    %10 = vector.load %arg4[%c0_8, %c0_9, %c0_10] : memref<1x8x128xf32, #tpu.memory_space<vmem>>, vector<1x8x128xf32>
    %11 = vector.shape_cast %10 : vector<1x8x128xf32> to vector<8x128xf32>
    %12 = vector.shape_cast %9 : vector<8x128xf32> to vector<1x8x128xf32>
    tpu.vector_store %arg4[%c0_8, %c0_9, %c0_10], %12 {strides = array<i32>} : memref<1x8x128xf32, #tpu.memory_space<vmem>>, vector<1x8x128xf32>,
    return
  }
  func.func @transform_0(%arg0: i32) -> (i32, i32, i32) {
    %c0_i32 = arith.constant 0 : i32
    %c0_i32_0 = arith.constant 0 : i32
    %c0_i32_1 = arith.constant 0 : i32
    return %arg0, %c0_i32, %c0_i32_0 : i32, i32, i32
  }
  func.func @transform_1(%arg0: i32) -> (i32, i32) {
    %c0_i32 = arith.constant 0 : i32
    %c0_i32_0 = arith.constant 0 : i32
    %c0_i32_1 = arith.constant 0 : i32
    return %c0_i32, %c0_i32_0 : i32, i32
  }
  func.func @transform_2(%arg0: i32) -> (i32, i32) {
    %c0_i32 = arith.constant 0 : i32
    %c0_i32_0 = arith.constant 0 : i32
    %c0_i32_1 = arith.constant 0 : i32
    return %c0_i32, %c0_i32_0 : i32, i32
  }
  func.func @transform_3(%arg0: i32) -> (i32, i32, i32) {
    %c0_i32 = arith.constant 0 : i32
    %c0_i32_0 = arith.constant 0 : i32
    %c0_i32_1 = arith.constant 0 : i32
    return %arg0, %c0_i32, %c0_i32_0 : i32, i32, i32
  }
}

</mosaic_0001>

<llo_original>
// kernel: tpu_custom_call.1
$region0: #{tpu_custom_call.1}
  #allocation0 [shape = 'u32[]', space=smem, size = 0x4, offset = 0x4, fixed_abs, tag = 'smem constant byte address 0x4 - core index']
  #allocation1 [shape = 'u32[144,128]{1,0:T(1,128)}', space=vmem, size = 0x12000, scoped, tag = 'internal scratch']
  %s0 = inlined_call_operand.hbm [shape: f32[2,4,130], index: 0, kind: input, shape index: {}]
  %s1 = inlined_call_operand.vmem [shape: f32[8,8], index: 1, kind: input, shape index: {}]
  %s2 = inlined_call_operand.vmem [shape: f32[8,1], index: 2, kind: input, shape index: {}]
  %s3 = inlined_call_operand.hbm [shape: f32[2,8,128], index: 3, kind: output, shape index: {}]
  %s4 = sld [smem:[#allocation0]]
  $region49: #{tpu_custom_call.1} parent=0
    _
  %s6 = ssub.s32 1, %s4
  %s7 = scalar_select 0, %s6, %s4
  $region1: #{tpu_custom_call.1} parent=0
    #allocation2 [shape = 'u8[8192]{0}', space=vmem, size = 0x2000, scoped, tag = 'input window, operand 0']
    #allocation3 [shape = 's32[2]{0}', space=sflag, size = 0x8, scoped, tag = 'scoped memory for tpu_custom_call.1']
    #allocation4 [shape = 's32[2]{0}', space=sflag, size = 0x8, scoped, tag = 'scoped memory for tpu_custom_call.1']
    #allocation5 [shape = 'u8[8192]{0}', space=vmem, size = 0x2000, scoped, tag = 'output window, operand 0']
    %8 = vsyncpa [#allocation3], 0
    %s9 = scalar_lea.sflag [#allocation3], 1
    %10 = vsyncpa %s9, 0
    %11 = vsyncpa [#allocation4], 0
    %s12 = scalar_lea.sflag [#allocation4], 1
    %13 = vsyncpa %s12, 0
    loop: start=0, step=1, limit=4
    $region2: #{tpu_custom_call.1} parent=1 // loop_pre_header
      _
    $region3: #{tpu_custom_call.1} parent=1 // loop_header
      %s15 = sphi 0, %s19
      %p16 = scmp.ge.s32.totalorder %s15, 4
      %s25 = sphi 0, %s27
      %s28 = sphi 0, %s25
      %s29 = sphi 0, %s28
      %s45 = sphi 0, %s29
      %s49 = sphi 0, %s49
      %s51 = sphi 0, %s49
      %s52 = sphi 0, %s51
      %s66 = sphi 0, %s52
      %s70 = sphi 0, %s70
      %s72 = sphi 0, %s70
      %s73 = sphi 0, %s72
      %s87 = sphi 0, %s73
      %s93 = sphi 0, %s95
      %s96 = sphi 0, %s93
      %s97 = sphi 0, %s96
      %s113 = sphi 0, %s97
    $region4: #{tpu_custom_call.1} parent=1 // loop_header_branch
      %18 = sbr.rel (%p16) target = $region8
    $region5: #{tpu_custom_call.1} parent=1 // loop_body
      %s20 = ssub.s32 %s15, 1
      %s21 = ssub.s32 %s15, 2
      %s22 = sadd.s32 %s15, 1
      %s23 = ssub.s32 %s15, %s22
      %p24 = scmp.eq.s32.totalorder %s23, 0
      %s26 = sadd.s32 %s25, 1
      %s27 = scalar_select %p24, %s25, %s26
      %p30 = pneg %p24
      %p31 = scmp.eq.s32.totalorder %s15, 1
      %p32 = por %p30, %p31
      %p33 = scmp.ne.s32.totalorder %s25, %s28
      %p34 = scmp.eq.s32.totalorder %s15, 0
      %p35 = por %p33, %p34
      %p36 = scmp.ne.s32.totalorder %s25, %s28
      %p37 = scmp.eq.s32.totalorder %s20, 1
      %p38 = por %p36, %p37
      %p39 = scmp.ne.s32.totalorder %s28, %s29
      %p40 = scmp.eq.s32.totalorder %s20, 0
      %p41 = por %p39, %p40
      %p42 = scmp.ne.s32.totalorder %s28, %s29
      %p43 = scmp.eq.s32.totalorder %s21, 1
      %p44 = por %p42, %p43
      %p46 = scmp.ne.s32.totalorder %s29, %s45
      %p47 = scmp.eq.s32.totalorder %s21, 0
      %p48 = por %p46, %p47
      %s50 = sadd.s32 %s49, 1
      %p53 = scmp.eq.s32.totalorder %s15, 1
      %p54 = scmp.ne.s32.totalorder %s49, %s51
      %p55 = scmp.eq.s32.totalorder %s15, 0
      %p56 = por %p54, %p55
      %p57 = scmp.ne.s32.totalorder %s49, %s51
      %p58 = scmp.eq.s32.totalorder %s20, 1
      %p59 = por %p57, %p58
      %p60 = scmp.ne.s32.totalorder %s51, %s52
      %p61 = scmp.eq.s32.totalorder %s20, 0
      %p62 = por %p60, %p61
      %p63 = scmp.ne.s32.totalorder %s51, %s52
      %p64 = scmp.eq.s32.totalorder %s21, 1
      %p65 = por %p63, %p64
      %p67 = scmp.ne.s32.totalorder %s52, %s66
      %p68 = scmp.eq.s32.totalorder %s21, 0
      %p69 = por %p67, %p68
      %s71 = sadd.s32 %s70, 1
      %p74 = scmp.eq.s32.totalorder %s15, 1
      %p75 = scmp.ne.s32.totalorder %s70, %s72
      %p76 = scmp.eq.s32.totalorder %s15, 0
      %p77 = por %p75, %p76
      %p78 = scmp.ne.s32.totalorder %s70, %s72
      %p79 = scmp.eq.s32.totalorder %s20, 1
      %p80 = por %p78, %p79
      %p81 = scmp.ne.s32.totalorder %s72, %s73
      %p82 = scmp.eq.s32.totalorder %s20, 0
      %p83 = por %p81, %p82
      %p84 = scmp.ne.s32.totalorder %s72, %s73
      %p85 = scmp.eq.s32.totalorder %s21, 1
      %p86 = por %p84, %p85
      %p88 = scmp.ne.s32.totalorder %s73, %s87
      %p89 = scmp.eq.s32.totalorder %s21, 0
      %p90 = por %p88, %p89
      %s91 = ssub.s32 %s15, %s22
      %p92 = scmp.eq.s32.totalorder %s91, 0
      %s94 = sadd.s32 %s93, 1
      %s95 = scalar_select %p92, %s93, %s94
      %p98 = pneg %p92
      %p99 = scmp.eq.s32.totalorder %s15, 1
      %p100 = por %p98, %p99
      %p101 = scmp.ne.s32.totalorder %s93, %s96
      %p102 = scmp.eq.s32.totalorder %s15, 0
      %p103 = por %p101, %p102
      %p104 = scmp.ne.s32.totalorder %s93, %s96
      %p105 = scmp.eq.s32.totalorder %s20, 1
      %p106 = por %p104, %p105
      %p107 = scmp.ne.s32.totalorder %s96, %s97
      %p108 = scmp.eq.s32.totalorder %s20, 0
      %p109 = por %p107, %p108
      %p110 = scmp.ne.s32.totalorder %s96, %s97
      %p111 = scmp.eq.s32.totalorder %s21, 1
      %p112 = por %p110, %p111
      %p114 = scmp.ne.s32.totalorder %s97, %s113
      %p115 = scmp.eq.s32.totalorder %s21, 0
      %p116 = por %p114, %p115
      %p117 = scmp.le.s32.totalorder 1, %s15
      %p118 = scmp.lt.s32.totalorder %s15, 3
      %p119 = pnand %p117, %p118
      %p120 = pneg %p119
      // Predicated region
      $region9: #{tpu_custom_call.1} parent=5 // pred_check
        _
      $region10: #{tpu_custom_call.1} parent=5 // pred_check_branch
        %122 = sbr.rel (%p119) target = $region12
      $region11: #{tpu_custom_call.1} parent=5 // pred_region
        %s123 = ssub.s32 %s15, 1
        // Predicated region
        $region13: #{tpu_custom_call.1} parent=11 // pred_check
          %p124 = pneg %p62
        $region14: #{tpu_custom_call.1} parent=11 // pred_check_branch
          %126 = sbr.rel (%p124) target = $region16
        $region15: #{tpu_custom_call.1} parent=11 // pred_region
          _
        $region16: #{tpu_custom_call.1} parent=11 // pred_fallthru
          _
        // Predicated region
        $region17: #{tpu_custom_call.1} parent=11 // pred_check
          %p127 = pneg %p83
        $region18: #{tpu_custom_call.1} parent=11 // pred_check_branch
          %129 = sbr.rel (%p127) target = $region20
        $region19: #{tpu_custom_call.1} parent=11 // pred_region
          _
        $region20: #{tpu_custom_call.1} parent=11 // pred_fallthru
          _
      $region12: #{tpu_custom_call.1} parent=5 // pred_fallthru
        _
      %p130 = scmp.lt.s32.totalorder %s15, 2
      // Predicated region
      $region21: #{tpu_custom_call.1} parent=5 // pred_check
        %p131 = pneg %p130
      $region22: #{tpu_custom_call.1} parent=5 // pred_check_branch
        %133 = sbr.rel (%p131) target = $region24
      $region23: #{tpu_custom_call.1} parent=5 // pred_region
        // Predicated region
        $region25: #{tpu_custom_call.1} parent=23 // pred_check
          %p134 = pneg %p35
        $region26: #{tpu_custom_call.1} parent=23 // pred_check_branch
          %136 = sbr.rel (%p134) target = $region28
        $region27: #{tpu_custom_call.1} parent=23 // pred_region
          %s137 = sand.u32 %s25, 1
          %s138 = scalar_lea.sflag [#allocation3], %s137
          %s139 = sand.u32 %s25, 1
          %s140 = smul.addr %s139, 8
          %s141 = scalar_lea.vmem [#allocation2], %s140
          %s143 = ssub.s32 128, 128
          %144 = vsyncadd %s138, %s143
          %s145 = smul.addr %s15, 2
          %s146 = smul.addr %s145, 64
          %s147 = scalar_lea.hbm %s0, %s146
          %s149 = sshll.u32 %s141, 4
          %s150 = int_to_ptr.vmem [resolvable:$true] %s149
          %152 = dma.hbm_to_vmem [thread:$0]  %s147, 128, %s150, %s138
        $region28: #{tpu_custom_call.1} parent=23 // pred_fallthru
          _
      $region24: #{tpu_custom_call.1} parent=5 // pred_fallthru
        _
      %p153 = scmp.le.s32.totalorder 1, %s15
      %p154 = scmp.lt.s32.totalorder %s15, 3
      %p155 = pnand %p153, %p154
      %p156 = pneg %p155
      // Predicated region
      $region29: #{tpu_custom_call.1} parent=5 // pred_check
        _
      $region30: #{tpu_custom_call.1} parent=5 // pred_check_branch
        %158 = sbr.rel (%p155) target = $region32
      $region31: #{tpu_custom_call.1} parent=5 // pred_region
        %s159 = ssub.s32 %s15, 1
        %s160 = sand.u32 %s28, 1
        %s161 = scalar_lea.sflag [#allocation3], %s160
        %s162 = sand.u32 %s28, 1
        %s163 = smul.addr %s162, 8
        %s164 = scalar_lea.vmem [#allocation2], %s163
        // Predicated region
        $region33: #{tpu_custom_call.1} parent=31 // pred_check
          %p165 = pneg %p41
        $region34: #{tpu_custom_call.1} parent=31 // pred_check_branch
          %167 = sbr.rel (%p165) target = $region36
        $region35: #{tpu_custom_call.1} parent=31 // pred_region
          %168 = dma.done %s161, 128
        $region36: #{tpu_custom_call.1} parent=31 // pred_fallthru
          _
        %s169 = sand.u32 %s28, 1
        %s170 = scalar_lea.sflag [#allocation3], %s169
        %s171 = sand.u32 %s28, 1
        %s172 = smul.addr %s171, 8
        %s173 = scalar_lea.vmem [#allocation2], %s172
        %p174 = pneg %p41
        %p175 = pneg %p38
        %p176 = pneg %p62
        %p177 = pneg %p59
        %p178 = pneg %p83
        %p179 = pneg %p80
        %p180 = pneg %p109
        %p181 = pneg %p106
        %s182 = sand.u32 %s96, 1
        %s183 = scalar_lea.sflag [#allocation4], %s182
        %s184 = sand.u32 %s96, 1
        %s185 = smul.addr %s184, 8
        %s186 = scalar_lea.vmem [#allocation5], %s185
        %v187 = vld [vmem:[%s164] sm:$0xf]
        %v188 = vld [vmem:[%s164] sm:$0xff]
        %v190 = vcombine.low %v188, %v188
        %191 = vrot.lane.b32.xlu0 %v190, 126
        %v192 = vpop.permute.xlu0 %191
        %193 = vrot.lane.b32.xlu0 %v188, 126
        %v194 = vpop.permute.xlu0 %193
        %vm195 = vcmask 1031168
        %v196 = vsel %vm195, %v192, %v194
        %vm198 = vcmask 1043456
        %v199 = vsel %vm198, %v187, %v196
        %v200 = vld [vmem:[%s1] sm:$0xff]
        %v201 = vld [vmem:[%s2] sm:$0xff]
        %203 = vset.pattern.permute.xlu0 0
        %204 = vperm.xlu0 %203, %v201
        %v205 = vpop.permute.xlu0 %204
        %vm207 = vcmask 64512
        %v209 = vsel %vm207, %v200, 0
        %211 = vmatprep.subr.mxu0 0.0
        %212 = vmatpush1.msra.mxu0 0.0
        %213 = vmatprep.subr.mxu0 0.0
        %214 = vmatpush1.msra.mxu0 0.0
        %215 = vmatprep.subr.mxu0 0.0
        %216 = vmatpush1.msra.mxu0 0.0
        %217 = vmatprep.subr.mxu0 0.0
        %218 = vmatpush1.msra.mxu0 0.0
        %219 = vmatprep.subr.mxu0 0.0
        %220 = vmatpush1.msra.mxu0 0.0
        %221 = vmatprep.subr.mxu0 0.0
        %222 = vmatpush1.msra.mxu0 0.0
        %223 = vmatprep.subr.mxu0 0.0
        %224 = vmatpush1.msra.mxu0 0.0
        %225 = vmatprep.subr.mxu0 0.0
        %226 = vmatpush1.msra.mxu0 0.0
        %227 = vmatprep.subr.mxu0 0.0
        %228 = vmatpush1.msra.mxu0 0.0
        %229 = vmatprep.subr.mxu0 0.0
        %230 = vmatpush1.msra.mxu0 0.0
        %231 = vmatprep.subr.mxu0 0.0
        %232 = vmatpush1.msra.mxu0 0.0
        %233 = vmatprep.subr.mxu0 0.0
        %234 = vmatpush1.msra.mxu0 0.0
        %235 = vmatprep.subr.mxu0 0.0
        %236 = vmatpush1.msra.mxu0 0.0
        %237 = vmatprep.subr.mxu0 0.0
        %238 = vmatpush1.msra.mxu0 0.0
        %239 = vmatprep.subr.mxu0 0.0
        %240 = vmatpush1.msra.mxu0 0.0
        %241 = vmatprep.subr.mxu0 0.0
        %242 = vmatpush1.msra.mxu0 %v199
        %243 = vmatprep.subr.mxu0 0.0
        %244 = vmatpush2.msra.mxu0 0.0
        %245 = vmatprep.subr.mxu0 0.0
        %246 = vmatpush2.msra.mxu0 0.0
        %247 = vmatprep.subr.mxu0 0.0
        %248 = vmatpush2.msra.mxu0 0.0
        %249 = vmatprep.subr.mxu0 0.0
        %250 = vmatpush2.msra.mxu0 0.0
        %251 = vmatprep.subr.mxu0 0.0
        %252 = vmatpush2.msra.mxu0 0.0
        %253 = vmatprep.subr.mxu0 0.0
        %254 = vmatpush2.msra.mxu0 0.0
        %255 = vmatprep.subr.mxu0 0.0
        %256 = vmatpush2.msra.mxu0 0.0
        %257 = vmatprep.subr.mxu0 0.0
        %258 = vmatpush2.msra.mxu0 0.0
        %259 = vmatprep.subr.mxu0 0.0
        %260 = vmatpush2.msra.mxu0 0.0
        %261 = vmatprep.subr.mxu0 0.0
        %262 = vmatpush2.msra.mxu0 0.0
        %263 = vmatprep.subr.mxu0 0.0
        %264 = vmatpush2.msra.mxu0 0.0
        %265 = vmatprep.subr.mxu0 0.0
        %266 = vmatpush2.msra.mxu0 0.0
        %267 = vmatprep.subr.mxu0 0.0
        %268 = vmatpush2.msra.mxu0 0.0
        %269 = vmatprep.subr.mxu0 0.0
        %270 = vmatpush2.msra.mxu0 0.0
        %271 = vmatprep.subr.mxu0 0.0
        %272 = vmatpush2.msra.mxu0 0.0
        %273 = vmatprep.subr.mxu0 0.0
        %274 = vmatpush2.msra.mxu0 0.0
        %275 = vmatprep.mubr.f32.mxu0 0.0
        %276 = vmatmul.mubr.f32.gmra.mxu0 %v209
        %v277 = vpop.f32.mrf.mxu0
        %v278 = vadd.f32 %v205, %v277
        %v279 = vpop.f32.mrf.mxu0
        %280 = vdwg.mxu0
        %281 = vst [vmem:[%s186] sm:$0xff] %v278
        %s282 = sand.u32 %s96, 1
        %s283 = scalar_lea.sflag [#allocation4], %s282
        %s284 = sand.u32 %s96, 1
        %s285 = smul.addr %s284, 8
        %s286 = scalar_lea.vmem [#allocation5], %s285
        // Predicated region
        $region37: #{tpu_custom_call.1} parent=31 // pred_check
          %p287 = pneg %p106
        $region38: #{tpu_custom_call.1} parent=31 // pred_check_branch
          %289 = sbr.rel (%p287) target = $region40
        $region39: #{tpu_custom_call.1} parent=31 // pred_region
          %s291 = ssub.s32 128, 128
          %292 = vsyncadd %s283, %s291
          %s293 = smul.addr %s20, 128
          %s294 = scalar_lea.hbm %s3, %s293
          %s296 = sshll.u32 %s286, 4
          %s297 = int_to_ptr.vmem [resolvable:$true] %s296
          %299 = dma.vmem_to_hbm [thread:$0]  %s297, 128, %s294, %s283
        $region40: #{tpu_custom_call.1} parent=31 // pred_fallthru
          _
      $region32: #{tpu_custom_call.1} parent=5 // pred_fallthru
        _
      %p300 = scmp.le.s32.totalorder 2, %s15
      // Predicated region
      $region41: #{tpu_custom_call.1} parent=5 // pred_check
        %p301 = pneg %p300
      $region42: #{tpu_custom_call.1} parent=5 // pred_check_branch
        %303 = sbr.rel (%p301) target = $region44
      $region43: #{tpu_custom_call.1} parent=5 // pred_region
        %s304 = ssub.s32 %s15, 2
        // Predicated region
        $region45: #{tpu_custom_call.1} parent=43 // pred_check
          %p305 = pneg %p112
        $region46: #{tpu_custom_call.1} parent=43 // pred_check_branch
          %307 = sbr.rel (%p305) target = $region48
        $region47: #{tpu_custom_call.1} parent=43 // pred_region
          %s308 = sand.u32 %s97, 1
          %s309 = scalar_lea.sflag [#allocation4], %s308
          %s310 = sand.u32 %s97, 1
          %s311 = smul.addr %s310, 8
          %s312 = scalar_lea.vmem [#allocation5], %s311
          %313 = dma.done %s309, 128
        $region48: #{tpu_custom_call.1} parent=43 // pred_fallthru
          _
      $region44: #{tpu_custom_call.1} parent=5 // pred_fallthru
        _
    $region6: #{tpu_custom_call.1} parent=1 // loop_footer
      %s19 = sadd.s32 1, %s15
    $region7: #{tpu_custom_call.1} parent=1 // loop_footer_branch
      %14 = sbr.rel target = $region3
    $region8: #{tpu_custom_call.1} parent=1 // loop_exit
      _
    %314 = vsyncpa [#allocation3], 1
    %s315 = scalar_lea.sflag [#allocation3], 1
    %316 = vsyncpa %s315, 1
    %317 = vsyncpa [#allocation4], 1
    %s318 = scalar_lea.sflag [#allocation4], 1
    %319 = vsyncpa %s318, 1

</llo_original>
